<compile_context>
chip_gen: v7x
topology: tpu7x:2x2x1
jax: 0.10.0
libtpu: 0.0.40
codegen_flags: <defaults>
</compile_context>

<pallas_src>
import functools

import jax
import jax.numpy as jnp
from jax.experimental import pallas as pl
from jax.experimental.pallas import tpu as pltpu

HID = 100        # true hidden width of the torch module
HID_PAD = 128    # hidden padded to one full vreg lane-width worth of sublane rows


def _round_up(x, m):
    return ((x + m - 1) // m) * m


# --------------------------------------------------------------------------- #
# Kernel: one batch tile per grid step, all (padded) weights VMEM-resident.
# Activations are feature-major [features, TB]; batch is the lane axis.
# --------------------------------------------------------------------------- #
def mlp_kernel(xt_ref, w1_ref, b1_ref, w2_ref, b2_ref, w3_ref, b3_ref, o_ref):
    xt = xt_ref[...]                                                        # [d_in, TB]
    h1 = jnp.dot(w1_ref[...], xt, preferred_element_type=jnp.float32)      # [HID_PAD, TB]
    h1 = jnp.maximum(h1 + b1_ref[...], 0.0)                                # bias+ReLU f32 (VPU)
    h2 = jnp.dot(w2_ref[...], h1.astype(w2_ref.dtype),
                 preferred_element_type=jnp.float32)                       # [HID_PAD, TB]
    h2 = jnp.maximum(h2 + b2_ref[...], 0.0)
    out = jnp.dot(w3_ref[...], h2.astype(w3_ref.dtype),
                  preferred_element_type=jnp.float32) + b3_ref[...]        # [out_pad, TB]
    o_ref[...] = out.astype(o_ref.dtype)


# --------------------------------------------------------------------------- #
# One-time parameter preparation (pad + cast) — keep out of the per-call path.
# Params are in torch layout: w [out_features, in_features], b [out_features].
# --------------------------------------------------------------------------- #
def prepare_params(params, compute_dtype=jnp.bfloat16):
    w1, b1, w2, b2, w3, b3 = params
    out_dim = w3.shape[0]
    out_pad = max(8, _round_up(out_dim, 8))

    def padw(w, rows, cols):
        return jnp.pad(
            w, ((0, rows - w.shape[0]), (0, cols - w.shape[1]))
        ).astype(compute_dtype)

    def padb(b, rows):
        # Biases stay f32: bias-add / ReLU run in f32 on the VPU.
        return jnp.pad(b.reshape(-1, 1), ((0, rows - b.shape[0]), (0, 0))).astype(jnp.float32)

    w1p = padw(w1, HID_PAD, w1.shape[1])      # [HID_PAD, d_in]  (K kept unpadded)
    w2p = padw(w2, HID_PAD, HID_PAD)          # [HID_PAD, HID_PAD]
    w3p = padw(w3, out_pad, HID_PAD)          # [out_pad, HID_PAD]
    prepared = (w1p, padb(b1, HID_PAD), w2p, padb(b2, HID_PAD), w3p, padb(b3, out_pad))
    return prepared, out_dim


# --------------------------------------------------------------------------- #
# Pallas forward pass.
# --------------------------------------------------------------------------- #
@functools.partial(jax.jit, static_argnums=(2,), static_argnames=("tile_b",))
def network_forward_pallas(x, prepared, out_dim, *, tile_b=512):
    w1p, b1p, w2p, b2p, w3p, b3p = prepared
    cdt = w1p.dtype
    B, d_in = x.shape
    out_pad = w3p.shape[0]

    # Batch tiling (lane axis): multiples of 128; keep >=2 grid steps when the
    # batch allows so ("parallel",) can use both TensorCores on v7x.
    bp128 = _round_up(B, 128)
    TB = min(max(128, (tile_b // 128) * 128), bp128)
    if bp128 > 128 and pl.cdiv(bp128, TB) < 2:
        TB = max(128, ((bp128 // 2) // 128) * 128)
    grid = (pl.cdiv(bp128, TB),)
    Bp = grid[0] * TB

    # Pad batch, cast once, go feature-major: [d_in, Bp].
    xt = jnp.pad(x, ((0, Bp - B), (0, 0))).astype(cdt).T

    resident = lambda shape: pl.BlockSpec(shape, lambda i: (0, 0))  # DMA'd once, stays in VMEM

    flops = 2 * Bp * (d_in * HID_PAD + HID_PAD * HID_PAD + HID_PAD * out_pad)
    wbytes = (d_in * HID_PAD + HID_PAD * HID_PAD + HID_PAD * out_pad) * w1p.dtype.itemsize
    bytes_accessed = (
        Bp * d_in * xt.dtype.itemsize          # x tiles
        + wbytes + (2 * HID_PAD + out_pad) * 4  # resident weights + biases (once)
        + Bp * out_pad * 4                      # output writeback
    )

    out_padded = pl.pallas_call(
        mlp_kernel,
        out_shape=jax.ShapeDtypeStruct((out_pad, Bp), jnp.float32),
        grid=grid,
        in_specs=[
            pl.BlockSpec((d_in, TB), lambda i: (0, i)),   # x^T: tiled over batch (lane-dense)
            resident((HID_PAD, d_in)),                    # w1
            resident((HID_PAD, 1)),                       # b1
            resident((HID_PAD, HID_PAD)),                 # w2
            resident((HID_PAD, 1)),                       # b2
            resident((out_pad, HID_PAD)),                 # w3
            resident((out_pad, 1)),                       # b3
        ],
        out_specs=pl.BlockSpec((out_pad, TB), lambda i: (0, i)),
        compiler_params=pltpu.CompilerParams(
            dimension_semantics=("parallel",),            # megacore sharding on v7x
        ),
        cost_estimate=pl.CostEstimate(
            flops=flops, transcendentals=0, bytes_accessed=bytes_accessed
        ),
    )(xt, w1p, b1p, w2p, b2p, w3p, b3p)

    # Small plain-JAX slice/transpose back to [B, out_dim] (out_pad is only 8 rows).
    return out_padded[:out_dim, :B].T


def network_forward(x, params, prepared, out_dim, *, tile_b=512, min_pallas_batch=256):
    """Dispatcher: tiny latency-critical batches (e.g. per-step action selection)
    stay in plain XLA; larger batches use the Pallas kernel."""
    if x.shape[0] < min_pallas_batch:
        return reference_forward(x, params)
    return network_forward_pallas(x, prepared, out_dim, tile_b=tile_b)


# --------------------------------------------------------------------------- #
# Reference / init (torch.nn.Linear semantics, torch [out, in] weight layout).
# --------------------------------------------------------------------------- #
def init_params(key, input_dim, output_dim, hidden=HID):
    def linear(k, fan_in, fan_out):
        kw, kb = jax.random.split(k)
        bound = 1.0 / jnp.sqrt(jnp.float32(fan_in))
        w = jax.random.uniform(kw, (fan_out, fan_in), jnp.float32, -bound, bound)
        b = jax.random.uniform(kb, (fan_out,), jnp.float32, -bound, bound)
        return w, b

    k1, k2, k3 = jax.random.split(key, 3)
    w1, b1 = linear(k1, input_dim, hidden)
    w2, b2 = linear(k2, hidden, hidden)
    w3, b3 = linear(k3, hidden, output_dim)
    return (w1, b1, w2, b2, w3, b3)


def reference_forward(x, params):
    w1, b1, w2, b2, w3, b3 = params
    h1 = jnp.maximum(x @ w1.T + b1, 0.0)
    h2 = jnp.maximum(h1 @ w2.T + b2, 0.0)
    return h2 @ w3.T + b3


if __name__ == "__main__":
    key = jax.random.PRNGKey(0)
    kx, kp, kx2 = jax.random.split(key, 3)

    input_dim, output_dim = 4, 2
    params = init_params(kp, input_dim, output_dim)

    # Small demo batch (matches DQN-style usage) + a larger one exercising
    # batch padding and a multi-step ("parallel") grid.
    x_small = jax.random.normal(kx, (8, input_dim), jnp.float32)
    x_big = jax.random.normal(kx2, (300, input_dim), jnp.float32)

    # f32 path: exact fp32 torch semantics (validation).
    prep_f32, out_dim = prepare_params(params, compute_dtype=jnp.float32)
    # bf16 path: MXU-rate matmul operands, f32 accumulation + f32 bias/ReLU.
    prep_bf16, _ = prepare_params(params, compute_dtype=jnp.bfloat16)

    for x in (x_small, x_big):
        ref = reference_forward(x, params)

        out_f32 = jax.block_until_ready(network_forward_pallas(x, prep_f32, out_dim))
        assert out_f32.shape == ref.shape
        assert jnp.allclose(out_f32, ref, atol=1e-3, rtol=1e-3), "f32 kernel mismatch"

        out_bf16 = jax.block_until_ready(network_forward_pallas(x, prep_bf16, out_dim))
        assert out_bf16.shape == ref.shape
        assert jnp.allclose(out_bf16, ref, atol=1e-1, rtol=1e-1), "bf16 kernel mismatch"

    print("KERNEL_OK")
</pallas_src>

<mosaic_0001>
module attributes {stable_mosaic.version = 11 : i64} {
  func.func @mlp_kernel(%arg0: i32, %arg1: memref<4x128xf32, #tpu.memory_space<vmem>>, %arg2: memref<128x4xf32, #tpu.memory_space<vmem>>, %arg3: memref<128x1xf32, #tpu.memory_space<vmem>>, %arg4: memref<128x128xf32, #tpu.memory_space<vmem>>, %arg5: memref<128x1xf32, #tpu.memory_space<vmem>>, %arg6: memref<8x128xf32, #tpu.memory_space<vmem>>, %arg7: memref<8x1xf32, #tpu.memory_space<vmem>>, %arg8: memref<8x128xf32, #tpu.memory_space<vmem>>) attributes {dimension_semantics = [#tpu.dimension_semantics<parallel>], iteration_bounds = array<i64: 1>, scalar_prefetch = 0 : i64, scratch_operands = 0 : i64, tpu.core_type = #tpu.core_type<tc>, window_params = [{transform_indices = @transform_0, window_bounds = array<i64: 4, 128>}, {pipeline_mode = #tpu.pipeline_mode<synchronous>, transform_indices = @transform_1, window_bounds = array<i64: 128, 4>}, {pipeline_mode = #tpu.pipeline_mode<synchronous>, transform_indices = @transform_2, window_bounds = array<i64: 128, 1>}, {pipeline_mode = #tpu.pipeline_mode<synchronous>, transform_indices = @transform_3, window_bounds = array<i64: 128, 128>}, {pipeline_mode = #tpu.pipeline_mode<synchronous>, transform_indices = @transform_4, window_bounds = array<i64: 128, 1>}, {pipeline_mode = #tpu.pipeline_mode<synchronous>, transform_indices = @transform_5, window_bounds = array<i64: 8, 128>}, {pipeline_mode = #tpu.pipeline_mode<synchronous>, transform_indices = @transform_6, window_bounds = array<i64: 8, 1>}, {transform_indices = @transform_7, window_bounds = array<i64: 8, 128>}]} {
    %c0 = arith.constant 0 : index
    %c0_0 = arith.constant 0 : index
    %0 = vector.load %arg1[%c0, %c0_0] : memref<4x128xf32, #tpu.memory_space<vmem>>, vector<4x128xf32>
    %c0_1 = arith.constant 0 : index
    %c0_2 = arith.constant 0 : index
    %1 = vector.load %arg2[%c0_1, %c0_2] : memref<128x4xf32, #tpu.memory_space<vmem>>, vector<128x4xf32>
    %cst = arith.constant dense<0.000000e+00> : vector<128x128xf32>
    %2 = tpu.matmul %1, %0, %cst {dimension_numbers = #tpu.dot_dimension_numbers<[1], [0], [0], [1], [0, 0, 1, 1], [], []>} : vector<128x4xf32>, vector<4x128xf32>, vector<128x128xf32> -> vector<128x128xf32>
    %c0_3 = arith.constant 0 : index
    %c0_4 = arith.constant 0 : index
    %3 = vector.load %arg3[%c0_3, %c0_4] : memref<128x1xf32, #tpu.memory_space<vmem>>, vector<128x1xf32>
    %4 = vector.broadcast %3 : vector<128x1xf32> to vector<128x128xf32>
    %5 = arith.addf %2, %4 : vector<128x128xf32>
    %cst_5 = arith.constant 0.000000e+00 : f32
    %6 = vector.broadcast %cst_5 : f32 to vector<128x128xf32>
    %7 = arith.maximumf %5, %6 : vector<128x128xf32>
    %c0_6 = arith.constant 0 : index
    %c0_7 = arith.constant 0 : index
    %8 = vector.load %arg4[%c0_6, %c0_7] : memref<128x128xf32, #tpu.memory_space<vmem>>, vector<128x128xf32>
    %cst_8 = arith.constant dense<0.000000e+00> : vector<128x128xf32>
    %9 = tpu.matmul %8, %7, %cst_8 {dimension_numbers = #tpu.dot_dimension_numbers<[1], [0], [0], [1], [0, 0, 1, 1], [], []>} : vector<128x128xf32>, vector<128x128xf32>, vector<128x128xf32> -> vector<128x128xf32>
    %c0_9 = arith.constant 0 : index
    %c0_10 = arith.constant 0 : index
    %10 = vector.load %arg5[%c0_9, %c0_10] : memref<128x1xf32, #tpu.memory_space<vmem>>, vector<128x1xf32>
    %11 = vector.broadcast %10 : vector<128x1xf32> to vector<128x128xf32>
    %12 = arith.addf %9, %11 : vector<128x128xf32>
    %cst_11 = arith.constant 0.000000e+00 : f32
    %13 = vector.broadcast %cst_11 : f32 to vector<128x128xf32>
    %14 = arith.maximumf %12, %13 : vector<128x128xf32>
    %c0_12 = arith.constant 0 : index
    %c0_13 = arith.constant 0 : index
    %15 = vector.load %arg6[%c0_12, %c0_13] : memref<8x128xf32, #tpu.memory_space<vmem>>, vector<8x128xf32>
    %cst_14 = arith.constant dense<0.000000e+00> : vector<8x128xf32>
    %16 = tpu.matmul %15, %14, %cst_14 {dimension_numbers = #tpu.dot_dimension_numbers<[1], [0], [0], [1], [0, 0, 1, 1], [], []>} : vector<8x128xf32>, vector<128x128xf32>, vector<8x128xf32> -> vector<8x128xf32>
    %c0_15 = arith.constant 0 : index
    %c0_16 = arith.constant 0 : index
    %17 = vector.load %arg7[%c0_15, %c0_16] : memref<8x1xf32, #tpu.memory_space<vmem>>, vector<8x1xf32>
    %18 = vector.broadcast %17 : vector<8x1xf32> to vector<8x128xf32>
    %19 = arith.addf %16, %18 : vector<8x128xf32>
    %c0_17 = arith.constant 0 : index
    %c0_18 = arith.constant 0 : index
    %20 = vector.load %arg8[%c0_17, %c0_18] : memref<8x128xf32, #tpu.memory_space<vmem>>, vector<8x128xf32>
    tpu.vector_store %arg8[%c0_17, %c0_18], %19 {strides = array<i32>} : memref<8x128xf32, #tpu.memory_space<vmem>>, vector<8x128xf32>,
    return
  }
  func.func @transform_0(%arg0: i32) -> (i32, i32) {
    %c0_i32 = arith.constant 0 : i32
    %c0_i32_0 = arith.constant 0 : i32
    return %c0_i32, %arg0 : i32, i32
  }
  func.func @transform_1(%arg0: i32) -> (i32, i32) {
    %c0_i32 = arith.constant 0 : i32
    %c0_i32_0 = arith.constant 0 : i32
    %c0_i32_1 = arith.constant 0 : i32
    return %c0_i32, %c0_i32_0 : i32, i32
  }
  func.func @transform_2(%arg0: i32) -> (i32, i32) {
    %c0_i32 = arith.constant 0 : i32
    %c0_i32_0 = arith.constant 0 : i32
    %c0_i32_1 = arith.constant 0 : i32
    return %c0_i32, %c0_i32_0 : i32, i32
  }
  func.func @transform_3(%arg0: i32) -> (i32, i32) {
    %c0_i32 = arith.constant 0 : i32
    %c0_i32_0 = arith.constant 0 : i32
    %c0_i32_1 = arith.constant 0 : i32
    return %c0_i32, %c0_i32_0 : i32, i32
  }
  func.func @transform_4(%arg0: i32) -> (i32, i32) {
    %c0_i32 = arith.constant 0 : i32
    %c0_i32_0 = arith.constant 0 : i32
    %c0_i32_1 = arith.constant 0 : i32
    return %c0_i32, %c0_i32_0 : i32, i32
  }
  func.func @transform_5(%arg0: i32) -> (i32, i32) {
    %c0_i32 = arith.constant 0 : i32
    %c0_i32_0 = arith.constant 0 : i32
    %c0_i32_1 = arith.constant 0 : i32
    return %c0_i32, %c0_i32_0 : i32, i32
  }
  func.func @transform_6(%arg0: i32) -> (i32, i32) {
    %c0_i32 = arith.constant 0 : i32
    %c0_i32_0 = arith.constant 0 : i32
    %c0_i32_1 = arith.constant 0 : i32
    return %c0_i32, %c0_i32_0 : i32, i32
  }
  func.func @transform_7(%arg0: i32) -> (i32, i32) {
    %c0_i32 = arith.constant 0 : i32
    %c0_i32_0 = arith.constant 0 : i32
    return %c0_i32, %arg0 : i32, i32
  }
}

</mosaic_0001>

<llo_original>
// kernel: network_forward_pallas.1
$region0: #{network_forward_pallas.1}
  #allocation0 [shape = 'u32[]', space=smem, size = 0x4, offset = 0x4, fixed_abs, tag = 'smem constant byte address 0x4 - core index']
  #allocation1 [shape = 'u32[144,128]{1,0:T(1,128)}', space=vmem, size = 0x12000, scoped, tag = 'internal scratch']
  %s0 = inlined_call_operand.vmem [shape: f32[4,128], index: 0, kind: input, shape index: {}]
  %s1 = inlined_call_operand.vmem [shape: f32[128,4], index: 1, kind: input, shape index: {}]
  %s2 = inlined_call_operand.vmem [shape: f32[128,1], index: 2, kind: input, shape index: {}]
  %s3 = inlined_call_operand.vmem [shape: f32[128,128], index: 3, kind: input, shape index: {}]
  %s4 = inlined_call_operand.vmem [shape: f32[128,1], index: 4, kind: input, shape index: {}]
  %s5 = inlined_call_operand.vmem [shape: f32[8,128], index: 5, kind: input, shape index: {}]
  %s6 = inlined_call_operand.vmem [shape: f32[8,1], index: 6, kind: input, shape index: {}]
  %s7 = inlined_call_operand.vmem [shape: f32[8,128], index: 7, kind: output, shape index: {}]
  %s8 = sld [smem:[#allocation0]]
  $region38: #{network_forward_pallas.1} parent=0
    _
  %s10 = ssub.s32 1, %s8
  %s11 = scalar_select 0, %s10, %s8
  // Predicated region
  $region2: #{network_forward_pallas.1} parent=0 // pred_check
    _
  $region3: #{network_forward_pallas.1} parent=0 // pred_check_branch
    %13 = sbr.rel (0) target = $region5
  $region4: #{network_forward_pallas.1} parent=0 // pred_region
    _
  $region5: #{network_forward_pallas.1} parent=0 // pred_fallthru
    _
  // Predicated region
  $region6: #{network_forward_pallas.1} parent=0 // pred_check
    _
  $region7: #{network_forward_pallas.1} parent=0 // pred_check_branch
    %15 = sbr.rel (0) target = $region9
  $region8: #{network_forward_pallas.1} parent=0 // pred_region
    _
  $region9: #{network_forward_pallas.1} parent=0 // pred_fallthru
    _
  // Predicated region
  $region10: #{network_forward_pallas.1} parent=0 // pred_check
    _
  $region11: #{network_forward_pallas.1} parent=0 // pred_check_branch
    %17 = sbr.rel (0) target = $region13
  $region12: #{network_forward_pallas.1} parent=0 // pred_region
    _
  $region13: #{network_forward_pallas.1} parent=0 // pred_fallthru
    _
  // Predicated region
  $region14: #{network_forward_pallas.1} parent=0 // pred_check
    _
  $region15: #{network_forward_pallas.1} parent=0 // pred_check_branch
    %19 = sbr.rel (0) target = $region17
  $region16: #{network_forward_pallas.1} parent=0 // pred_region
    _
  $region17: #{network_forward_pallas.1} parent=0 // pred_fallthru
    _
  // Predicated region
  $region18: #{network_forward_pallas.1} parent=0 // pred_check
    _
  $region19: #{network_forward_pallas.1} parent=0 // pred_check_branch
    %21 = sbr.rel (0) target = $region21
  $region20: #{network_forward_pallas.1} parent=0 // pred_region
    _
  $region21: #{network_forward_pallas.1} parent=0 // pred_fallthru
    _
  // Predicated region
  $region22: #{network_forward_pallas.1} parent=0 // pred_check
    _
  $region23: #{network_forward_pallas.1} parent=0 // pred_check_branch
    %23 = sbr.rel (0) target = $region25
  $region24: #{network_forward_pallas.1} parent=0 // pred_region
    _
  $region25: #{network_forward_pallas.1} parent=0 // pred_fallthru
    _
  // Predicated region
  $region26: #{network_forward_pallas.1} parent=0 // pred_check
    _
  $region27: #{network_forward_pallas.1} parent=0 // pred_check_branch
    %25 = sbr.rel (0) target = $region29
  $region28: #{network_forward_pallas.1} parent=0 // pred_region
    _
  $region29: #{network_forward_pallas.1} parent=0 // pred_fallthru
    _
  %v26 = vld [vmem:[%s0] sm:$0xf]
  %v27 = vld [vmem:[%s1] sm:$0xff]
  %v28 = vld [vmem:[%s1 + $0x8] sm:$0xff]
  %v29 = vld [vmem:[%s1 + $0x10] sm:$0xff]
  %v30 = vld [vmem:[%s1 + $0x18] sm:$0xff]
  %v31 = vld [vmem:[%s1 + $0x20] sm:$0xff]
  %v32 = vld [vmem:[%s1 + $0x28] sm:$0xff]
  %v33 = vld [vmem:[%s1 + $0x30] sm:$0xff]
  %v34 = vld [vmem:[%s1 + $0x38] sm:$0xff]
  %v35 = vld [vmem:[%s1 + $0x40] sm:$0xff]
  %v36 = vld [vmem:[%s1 + $0x48] sm:$0xff]
  %v37 = vld [vmem:[%s1 + $0x50] sm:$0xff]
  %v38 = vld [vmem:[%s1 + $0x58] sm:$0xff]
  %v39 = vld [vmem:[%s1 + $0x60] sm:$0xff]
  %v40 = vld [vmem:[%s1 + $0x68] sm:$0xff]
  %v41 = vld [vmem:[%s1 + $0x70] sm:$0xff]
  %v42 = vld [vmem:[%s1 + $0x78] sm:$0xff]
  %v43 = vld [vmem:[%s2] sm:$0xff]
  %v44 = vld [vmem:[%s2 + $0x8] sm:$0xff]
  %v45 = vld [vmem:[%s2 + $0x10] sm:$0xff]
  %v46 = vld [vmem:[%s2 + $0x18] sm:$0xff]
  %v47 = vld [vmem:[%s2 + $0x20] sm:$0xff]
  %v48 = vld [vmem:[%s2 + $0x28] sm:$0xff]
  %v49 = vld [vmem:[%s2 + $0x30] sm:$0xff]
  %v50 = vld [vmem:[%s2 + $0x38] sm:$0xff]
  %v51 = vld [vmem:[%s2 + $0x40] sm:$0xff]
  %v52 = vld [vmem:[%s2 + $0x48] sm:$0xff]
  %v53 = vld [vmem:[%s2 + $0x50] sm:$0xff]
  %v54 = vld [vmem:[%s2 + $0x58] sm:$0xff]
  %v55 = vld [vmem:[%s2 + $0x60] sm:$0xff]
  %v56 = vld [vmem:[%s2 + $0x68] sm:$0xff]
  %v57 = vld [vmem:[%s2 + $0x70] sm:$0xff]
  %v58 = vld [vmem:[%s2 + $0x78] sm:$0xff]
  %60 = vset.pattern.permute.xlu0 0
  %61 = vperm.xlu0 %60, %v43
  %v62 = vpop.permute.xlu0 %61
  %65 = vset.pattern.permute.xlu0 0
  %66 = vperm.xlu0 %65, %v44
  %v67 = vpop.permute.xlu0 %66
  %70 = vset.pattern.permute.xlu0 0
  %71 = vperm.xlu0 %70, %v45
  %v72 = vpop.permute.xlu0 %71
  %75 = vset.pattern.permute.xlu0 0
  %76 = vperm.xlu0 %75, %v46
  %v77 = vpop.permute.xlu0 %76
  %80 = vset.pattern.permute.xlu0 0
  %81 = vperm.xlu0 %80, %v47
  %v82 = vpop.permute.xlu0 %81
  %85 = vset.pattern.permute.xlu0 0
  %86 = vperm.xlu0 %85, %v48
  %v87 = vpop.permute.xlu0 %86
  %90 = vset.pattern.permute.xlu0 0
  %91 = vperm.xlu0 %90, %v49
  %v92 = vpop.permute.xlu0 %91
  %95 = vset.pattern.permute.xlu0 0
  %96 = vperm.xlu0 %95, %v50
  %v97 = vpop.permute.xlu0 %96
  %100 = vset.pattern.permute.xlu0 0
  %101 = vperm.xlu0 %100, %v51
  %v102 = vpop.permute.xlu0 %101
  %105 = vset.pattern.permute.xlu0 0
  %106 = vperm.xlu0 %105, %v52
  %v107 = vpop.permute.xlu0 %106
  %110 = vset.pattern.permute.xlu0 0
  %111 = vperm.xlu0 %110, %v53
  %v112 = vpop.permute.xlu0 %111
  %115 = vset.pattern.permute.xlu0 0
  %116 = vperm.xlu0 %115, %v54
  %v117 = vpop.permute.xlu0 %116
  %120 = vset.pattern.permute.xlu0 0
  %121 = vperm.xlu0 %120, %v55
  %v122 = vpop.permute.xlu0 %121
  %125 = vset.pattern.permute.xlu0 0
  %126 = vperm.xlu0 %125, %v56
  %v127 = vpop.permute.xlu0 %126
  %130 = vset.pattern.permute.xlu0 0
  %131 = vperm.xlu0 %130, %v57
  %v132 = vpop.permute.xlu0 %131
  %135 = vset.pattern.permute.xlu0 0
  %136 = vperm.xlu0 %135, %v58
  %v137 = vpop.permute.xlu0 %136
  %vm139 = vcmask 31744
  %v141 = vsel %vm139, %v27, 0
  %v144 = vsel %vm139, %v28, 0
  %v147 = vsel %vm139, %v29, 0
  %v150 = vsel %vm139, %v30, 0
  %v153 = vsel %vm139, %v31, 0
  %v156 = vsel %vm139, %v32, 0
  %v159 = vsel %vm139, %v33, 0
  %v162 = vsel %vm139, %v34, 0
  %v165 = vsel %vm139, %v35, 0
  %v168 = vsel %vm139, %v36, 0
  %v171 = vsel %vm139, %v37, 0
  %v174 = vsel %vm139, %v38, 0
  %v177 = vsel %vm139, %v39, 0
  %v180 = vsel %vm139, %v40, 0
  %v183 = vsel %vm139, %v41, 0
  %v186 = vsel %vm139, %v42, 0
  %vm188 = vcmask 1043456
  %v190 = vsel %vm188, %v26, 0
  %192 = vmatprep.subr.mxu0 0.0
  %193 = vmatpush1.msra.mxu0 %v190
  %194 = vmatprep.subr.mxu0 0.0
  %195 = vmatpush1.msra.mxu0 0.0
  %196 = vmatprep.subr.mxu0 0.0
  %197 = vmatpush1.msra.mxu0 0.0
  %198 = vmatprep.subr.mxu0 0.0
  %199 = vmatpush1.msra.mxu0 0.0
  %200 = vmatprep.subr.mxu0 0.0
  %201 = vmatpush1.msra.mxu0 0.0
  %202 = vmatprep.subr.mxu0 0.0
  %203 = vmatpush1.msra.mxu0 0.0
  %204 = vmatprep.subr.mxu0 0.0
  %205 = vmatpush1.msra.mxu0 0.0
  %206 = vmatprep.subr.mxu0 0.0
  %207 = vmatpush1.msra.mxu0 0.0
  %208 = vmatprep.subr.mxu0 0.0
  %209 = vmatpush1.msra.mxu0 0.0
  %210 = vmatprep.subr.mxu0 0.0
  %211 = vmatpush1.msra.mxu0 0.0
  %212 = vmatprep.subr.mxu0 0.0
  %213 = vmatpush1.msra.mxu0 0.0
  %214 = vmatprep.subr.mxu0 0.0
  %215 = vmatpush1.msra.mxu0 0.0
  %216 = vmatprep.subr.mxu0 0.0
  %217 = vmatpush1.msra.mxu0 0.0
  %218 = vmatprep.subr.mxu0 0.0
  %219 = vmatpush1.msra.mxu0 0.0
  %220 = vmatprep.subr.mxu0 0.0
  %221 = vmatpush1.msra.mxu0 0.0
  %222 = vmatprep.subr.mxu0 0.0
  %223 = vmatpush1.msra.mxu0 0.0
  %224 = vmatprep.subr.mxu0 0.0
  %225 = vmatpush1.msra.mxu0 0.0
  %226 = vmatprep.subr.mxu0 0.0
  %227 = vmatpush1.msra.mxu0 0.0
  %228 = vmatprep.subr.mxu0 0.0
  %229 = vmatpush1.msra.mxu0 0.0
  %230 = vmatprep.subr.mxu0 0.0
  %231 = vmatpush1.msra.mxu0 0.0
  %232 = vmatprep.subr.mxu0 0.0
  %233 = vmatpush1.msra.mxu0 0.0
  %234 = vmatprep.subr.mxu0 0.0
  %235 = vmatpush1.msra.mxu0 0.0
  %236 = vmatprep.subr.mxu0 0.0
  %237 = vmatpush1.msra.mxu0 0.0
  %238 = vmatprep.subr.mxu0 0.0
  %239 = vmatpush1.msra.mxu0 0.0
  %240 = vmatprep.subr.mxu0 0.0
  %241 = vmatpush1.msra.mxu0 0.0
  %242 = vmatprep.subr.mxu0 0.0
  %243 = vmatpush1.msra.mxu0 0.0
  %244 = vmatprep.subr.mxu0 0.0
  %245 = vmatpush1.msra.mxu0 0.0
  %246 = vmatprep.subr.mxu0 0.0
  %247 = vmatpush1.msra.mxu0 0.0
  %248 = vmatprep.subr.mxu0 0.0
  %249 = vmatpush1.msra.mxu0 0.0
  %250 = vmatprep.subr.mxu0 0.0
  %251 = vmatpush1.msra.mxu0 0.0
  %252 = vmatprep.subr.mxu0 0.0
  %253 = vmatpush1.msra.mxu0 0.0
  %254 = vmatprep.subr.mxu0 0.0
  %255 = vmatpush1.msra.mxu0 0.0
  %256 = vmatprep.mubr.f32.mxu0 0.0
  %257 = vmatmul.mubr.f32.gmra.mrb[0].mxu0 %v141
  %v258 = vpop.f32.mrb[0].mxu0
  %v259 = vadd.f32 %v62, %v258
  %v260 = vpop.f32.mrb[0].mxu0
  %261 = vmatprep.mubr.f32.mxu0 0.0
  %262 = vmatmul.mubr.f32.gmra.mrb[0].mxu0 %v144
  %v263 = vpop.f32.mrb[0].mxu0
  %v264 = vadd.f32 %v67, %v263
  %v265 = vpop.f32.mrb[0].mxu0
  %266 = vmatprep.mubr.f32.mxu0 0.0
  %267 = vmatmul.mubr.f32.gmra.mrb[0].mxu0 %v147
  %v268 = vpop.f32.mrb[0].mxu0
  %v269 = vadd.f32 %v72, %v268
  %v270 = vpop.f32.mrb[0].mxu0
  %271 = vmatprep.mubr.f32.mxu0 0.0
  %272 = vmatmul.mubr.f32.gmra.mrb[0].mxu0 %v150
  %v273 = vpop.f32.mrb[0].mxu0
  %v274 = vadd.f32 %v77, %v273
  %v275 = vpop.f32.mrb[0].mxu0
  %276 = vmatprep.mubr.f32.mxu0 0.0
  %277 = vmatmul.mubr.f32.gmra.mrb[0].mxu0 %v153
  %v278 = vpop.f32.mrb[0].mxu0
  %v279 = vadd.f32 %v82, %v278
  %v280 = vpop.f32.mrb[0].mxu0
  %281 = vmatprep.mubr.f32.mxu0 0.0
  %282 = vmatmul.mubr.f32.gmra.mrb[0].mxu0 %v156
  %v283 = vpop.f32.mrb[0].mxu0
  %v284 = vadd.f32 %v87, %v283
  %v285 = vpop.f32.mrb[0].mxu0
  %286 = vmatprep.mubr.f32.mxu0 0.0
  %287 = vmatmul.mubr.f32.gmra.mrb[0].mxu0 %v159
  %v288 = vpop.f32.mrb[0].mxu0
  %v289 = vadd.f32 %v92, %v288
  %v290 = vpop.f32.mrb[0].mxu0
  %291 = vmatprep.mubr.f32.mxu0 0.0
  %292 = vmatmul.mubr.f32.gmra.mrb[0].mxu0 %v162
  %v293 = vpop.f32.mrb[0].mxu0
  %v294 = vadd.f32 %v97, %v293
  %v295 = vpop.f32.mrb[0].mxu0
  %296 = vmatprep.mubr.f32.mxu0 0.0
  %297 = vmatmul.mubr.f32.gmra.mrb[0].mxu0 %v165
  %v298 = vpop.f32.mrb[0].mxu0
  %v299 = vadd.f32 %v102, %v298
  %v300 = vpop.f32.mrb[0].mxu0
  %301 = vmatprep.mubr.f32.mxu0 0.0
  %302 = vmatmul.mubr.f32.gmra.mrb[0].mxu0 %v168
  %v303 = vpop.f32.mrb[0].mxu0
  %v304 = vadd.f32 %v107, %v303
  %v305 = vpop.f32.mrb[0].mxu0
  %306 = vmatprep.mubr.f32.mxu0 0.0
  %307 = vmatmul.mubr.f32.gmra.mrb[0].mxu0 %v171
  %v308 = vpop.f32.mrb[0].mxu0
  %v309 = vadd.f32 %v112, %v308
  %v310 = vpop.f32.mrb[0].mxu0
  %311 = vmatprep.mubr.f32.mxu0 0.0
  %312 = vmatmul.mubr.f32.gmra.mrb[0].mxu0 %v174
  %v313 = vpop.f32.mrb[0].mxu0
  %v314 = vadd.f32 %v117, %v313
  %v315 = vpop.f32.mrb[0].mxu0
  %316 = vmatprep.mubr.f32.mxu0 0.0
  %317 = vmatmul.mubr.f32.gmra.mrb[0].mxu0 %v177
  %v318 = vpop.f32.mrb[0].mxu0
  %v319 = vadd.f32 %v122, %v318
  %v320 = vpop.f32.mrb[0].mxu0
  %321 = vmatprep.mubr.f32.mxu0 0.0
  %322 = vmatmul.mubr.f32.gmra.mrb[0].mxu0 %v180
  %v323 = vpop.f32.mrb[0].mxu0
  %v324 = vadd.f32 %v127, %v323
  %v325 = vpop.f32.mrb[0].mxu0
  %326 = vmatprep.mubr.f32.mxu0 0.0
  %327 = vmatmul.mubr.f32.gmra.mrb[0].mxu0 %v183
  %v328 = vpop.f32.mrb[0].mxu0
  %v329 = vadd.f32 %v132, %v328
  %v330 = vpop.f32.mrb[0].mxu0
  %331 = vmatprep.mubr.f32.mxu0 0.0
  %332 = vmatmul.mubr.f32.gmra.mrb[0].mxu0 %v186
  %v333 = vpop.f32.mrb[0].mxu0
  %v334 = vadd.f32 %v137, %v333
  %v335 = vpop.f32.mrb[0].mxu0
  %336 = vdwg.mxu0
  %v337 = vmax.f32 %v259, 0.0
  %v338 = vmax.f32 %v264, 0.0
  %v339 = vmax.f32 %v269, 0.0
  %v340 = vmax.f32 %v274, 0.0
  %v341 = vmax.f32 %v279, 0.0
  %v342 = vmax.f32 %v284, 0.0
  %v343 = vmax.f32 %v289, 0.0
  %v344 = vmax.f32 %v294, 0.0
  %v345 = vmax.f32 %v299, 0.0
  %v346 = vmax.f32 %v304, 0.0
  %v347 = vmax.f32 %v309, 0.0
  %v348 = vmax.f32 %v314, 0.0
  %v349 = vmax.f32 %v319, 0.0
  %v350 = vmax.f32 %v324, 0.0
  %v351 = vmax.f32 %v329, 0.0
  %v352 = vmax.f32 %v334, 0.0
  %v353 = vld [vmem:[%s3] sm:$0xff]
  %v354 = vld [vmem:[%s3 + $0x8] sm:$0xff]
  %v355 = vld [vmem:[%s3 + $0x10] sm:$0xff]
  %v356 = vld [vmem:[%s3 + $0x18] sm:$0xff]
  %v357 = vld [vmem:[%s3 + $0x20] sm:$0xff]
  %v358 = vld [vmem:[%s3 + $0x28] sm:$0xff]
  %v359 = vld [vmem:[%s3 + $0x30] sm:$0xff]
  %v360 = vld [vmem:[%s3 + $0x38] sm:$0xff]
  %v361 = vld [vmem:[%s3 + $0x40] sm:$0xff]
  %v362 = vld [vmem:[%s3 + $0x48] sm:$0xff]
  %v363 = vld [vmem:[%s3 + $0x50] sm:$0xff]
  %v364 = vld [vmem:[%s3 + $0x58] sm:$0xff]
  %v365 = vld [vmem:[%s3 + $0x60] sm:$0xff]
  %v366 = vld [vmem:[%s3 + $0x68] sm:$0xff]
  %v367 = vld [vmem:[%s3 + $0x70] sm:$0xff]
  %v368 = vld [vmem:[%s3 + $0x78] sm:$0xff]
  %v369 = vld [vmem:[%s4] sm:$0xff]
  %v370 = vld [vmem:[%s4 + $0x8] sm:$0xff]
  %v371 = vld [vmem:[%s4 + $0x10] sm:$0xff]
  %v372 = vld [vmem:[%s4 + $0x18] sm:$0xff]
  %v373 = vld [vmem:[%s4 + $0x20] sm:$0xff]
  %v374 = vld [vmem:[%s4 + $0x28] sm:$0xff]
  %v375 = vld [vmem:[%s4 + $0x30] sm:$0xff]
  %v376 = vld [vmem:[%s4 + $0x38] sm:$0xff]
  %v377 = vld [vmem:[%s4 + $0x40] sm:$0xff]
  %v378 = vld [vmem:[%s4 + $0x48] sm:$0xff]
  %v379 = vld [vmem:[%s4 + $0x50] sm:$0xff]
  %v380 = vld [vmem:[%s4 + $0x58] sm:$0xff]
  %v381 = vld [vmem:[%s4 + $0x60] sm:$0xff]
  %v382 = vld [vmem:[%s4 + $0x68] sm:$0xff]
  %v383 = vld [vmem:[%s4 + $0x70] sm:$0xff]
  %v384 = vld [vmem:[%s4 + $0x78] sm:$0xff]
  %386 = vset.pattern.permute.xlu0 0
  %387 = vperm.xlu0 %386, %v369
  %v388 = vpop.permute.xlu0 %387
  %391 = vset.pattern.permute.xlu0 0
  %392 = vperm.xlu0 %391, %v370
  %v393 = vpop.permute.xlu0 %392
  %396 = vset.pattern.permute.xlu0 0
  %397 = vperm.xlu0 %396, %v371
  %v398 = vpop.permute.xlu0 %397
  %401 = vset.pattern.permute.xlu0 0
  %402 = vperm.xlu0 %401, %v372
  %v403 = vpop.permute.xlu0 %402
  %406 = vset.pattern.permute.xlu0 0
  %407 = vperm.xlu0 %406, %v373
  %v408 = vpop.permute.xlu0 %407
  %411 = vset.pattern.permute.xlu0 0
  %412 = vperm.xlu0 %411, %v374
  %v413 = vpop.permute.xlu0 %412
  %416 = vset.pattern.permute.xlu0 0
  %417 = vperm.xlu0 %416, %v375
  %v418 = vpop.permute.xlu0 %417
  %421 = vset.pattern.permute.xlu0 0
  %422 = vperm.xlu0 %421, %v376
  %v423 = vpop.permute.xlu0 %422
  %426 = vset.pattern.permute.xlu0 0
  %427 = vperm.xlu0 %426, %v377
  %v428 = vpop.permute.xlu0 %427
  %431 = vset.pattern.permute.xlu0 0
  %432 = vperm.xlu0 %431, %v378
  %v433 = vpop.permute.xlu0 %432
  %436 = vset.pattern.permute.xlu0 0
  %437 = vperm.xlu0 %436, %v379
  %v438 = vpop.permute.xlu0 %437
  %441 = vset.pattern.permute.xlu0 0
  %442 = vperm.xlu0 %441, %v380
  %v443 = vpop.permute.xlu0 %442
  %446 = vset.pattern.permute.xlu0 0
  %447 = vperm.xlu0 %446, %v381
  %v448 = vpop.permute.xlu0 %447
  %451 = vset.pattern.permute.xlu0 0
  %452 = vperm.xlu0 %451, %v382
  %v453 = vpop.permute.xlu0 %452
  %456 = vset.pattern.permute.xlu0 0
  %457 = vperm.xlu0 %456, %v383
  %v458 = vpop.permute.xlu0 %457
  %461 = vset.pattern.permute.xlu0 0
  %462 = vperm.xlu0 %461, %v384
  %v463 = vpop.permute.xlu0 %462
  %465 = vmatprep.subr.mxu0 0.0
  %466 = vmatpush1.msra.mxu0 %v337
  %467 = vmatprep.subr.mxu0 0.0
  %468 = vmatpush1.msra.mxu0 %v338
  %469 = vmatprep.subr.mxu0 0.0
  %470 = vmatpush1.msra.mxu0 %v339
  %471 = vmatprep.subr.mxu0 0.0
  %472 = vmatpush1.msra.mxu0 %v340
  %473 = vmatprep.subr.mxu0 0.0
  %474 = vmatpush1.msra.mxu0 %v341
  %475 = vmatprep.subr.mxu0 0.0
  %476 = vmatpush1.msra.mxu0 %v342
  %477 = vmatprep.subr.mxu0 0.0
  %478 = vmatpush1.msra.mxu0 %v343
  %479 = vmatprep.subr.mxu0 0.0
  %480 = vmatpush1.msra.mxu0 %v344
  %481 = vmatprep.subr.mxu0 0.0
  %482 = vmatpush1.msra.mxu0 %v345
  %483 = vmatprep.subr.mxu0 0.0
  %484 = vmatpush1.msra.mxu0 %v346
  %485 = vmatprep.subr.mxu0 0.0
  %486 = vmatpush1.msra.mxu0 %v347
  %487 = vmatprep.subr.mxu0 0.0
  %488 = vmatpush1.msra.mxu0 %v348
  %489 = vmatprep.subr.mxu0 0.0
  %490 = vmatpush1.msra.mxu0 %v349
  %491 = vmatprep.subr.mxu0 0.0
  %492 = vmatpush1.msra.mxu0 %v350
  %493 = vmatprep.subr.mxu0 0.0
  %494 = vmatpush1.msra.mxu0 %v351
  %495 = vmatprep.subr.mxu0 0.0
  %496 = vmatpush1.msra.mxu0 %v352
  %497 = vmatprep.subr.mxu0 0.0
  %498 = vmatpush1.msra.mxu0 0.0
  %499 = vmatprep.subr.mxu0 0.0
  %500 = vmatpush1.msra.mxu0 0.0
  %501 = vmatprep.subr.mxu0 0.0
  %502 = vmatpush1.msra.mxu0 0.0
  %503 = vmatprep.subr.mxu0 0.0
  %504 = vmatpush1.msra.mxu0 0.0
  %505 = vmatprep.subr.mxu0 0.0
  %506 = vmatpush1.msra.mxu0 0.0
  %507 = vmatprep.subr.mxu0 0.0
  %508 = vmatpush1.msra.mxu0 0.0
  %509 = vmatprep.subr.mxu0 0.0
  %510 = vmatpush1.msra.mxu0 0.0
  %511 = vmatprep.subr.mxu0 0.0
  %512 = vmatpush1.msra.mxu0 0.0
  %513 = vmatprep.subr.mxu0 0.0
  %514 = vmatpush1.msra.mxu0 0.0
  %515 = vmatprep.subr.mxu0 0.0
  %516 = vmatpush1.msra.mxu0 0.0
  %517 = vmatprep.subr.mxu0 0.0
  %518 = vmatpush1.msra.mxu0 0.0
  %519 = vmatprep.subr.mxu0 0.0
  %520 = vmatpush1.msra.mxu0 0.0
  %521 = vmatprep.subr.mxu0 0.0
  %522 = vmatpush1.msra.mxu0 0.0
  %523 = vmatprep.subr.mxu0 0.0
  %524 = vmatpush1.msra.mxu0 0.0
  %525 = vmatprep.subr.mxu0 0.0
  %526 = vmatpush1.msra.mxu0 0.0
  %527 = vmatprep.subr.mxu0 0.0
  %528 = vmatpush1.msra.mxu0 0.0
  %529 = vmatprep.mubr.f32.mxu0 0.0
  %530 = vmatmul.mubr.f32.gmra.mrb[0].mxu0 %v353
  %v531 = vpop.f32.mrb[0].mxu0
  %v532 = vadd.f32 %v388, %v531
  %v533 = vpop.f32.mrb[0].mxu0
  %534 = vmatprep.mubr.f32.mxu0 0.0
  %535 = vmatmul.mubr.f32.gmra.mrb[0].mxu0 %v354
  %v536 = vpop.f32.mrb[0].mxu0
  %v537 = vadd.f32 %v393, %v536
  %v538 = vpop.f32.mrb[0].mxu0
  %539 = vmatprep.mubr.f32.mxu0 0.0
  %540 = vmatmul.mubr.f32.gmra.mrb[0].mxu0 %v355
  %v541 = vpop.f32.mrb[0].mxu0
  %v542 = vadd.f32 %v398, %v541
  %v543 = vpop.f32.mrb[0].mxu0
  %544 = vmatprep.mubr.f32.mxu0 0.0
  %545 = vmatmul.mubr.f32.gmra.mrb[0].mxu0 %v356
  %v546 = vpop.f32.mrb[0].mxu0
  %v547 = vadd.f32 %v403, %v546
  %v548 = vpop.f32.mrb[0].mxu0
  %549 = vmatprep.mubr.f32.mxu0 0.0
  %550 = vmatmul.mubr.f32.gmra.mrb[0].mxu0 %v357
  %v551 = vpop.f32.mrb[0].mxu0
  %v552 = vadd.f32 %v408, %v551
  %v553 = vpop.f32.mrb[0].mxu0
  %554 = vmatprep.mubr.f32.mxu0 0.0
  %555 = vmatmul.mubr.f32.gmra.mrb[0].mxu0 %v358
  %v556 = vpop.f32.mrb[0].mxu0
  %v557 = vadd.f32 %v413, %v556
  %v558 = vpop.f32.mrb[0].mxu0
  %559 = vmatprep.mubr.f32.mxu0 0.0
  %560 = vmatmul.mubr.f32.gmra.mrb[0].mxu0 %v359
  %v561 = vpop.f32.mrb[0].mxu0
  %v562 = vadd.f32 %v418, %v561
  %v563 = vpop.f32.mrb[0].mxu0
  %564 = vmatprep.mubr.f32.mxu0 0.0
  %565 = vmatmul.mubr.f32.gmra.mrb[0].mxu0 %v360
  %v566 = vpop.f32.mrb[0].mxu0
  %v567 = vadd.f32 %v423, %v566
  %v568 = vpop.f32.mrb[0].mxu0
  %569 = vmatprep.mubr.f32.mxu0 0.0
  %570 = vmatmul.mubr.f32.gmra.mrb[0].mxu0 %v361
  %v571 = vpop.f32.mrb[0].mxu0
  %v572 = vadd.f32 %v428, %v571
  %v573 = vpop.f32.mrb[0].mxu0
  %574 = vmatprep.mubr.f32.mxu0 0.0
  %575 = vmatmul.mubr.f32.gmra.mrb[0].mxu0 %v362
  %v576 = vpop.f32.mrb[0].mxu0
  %v577 = vadd.f32 %v433, %v576
  %v578 = vpop.f32.mrb[0].mxu0
  %579 = vmatprep.mubr.f32.mxu0 0.0
  %580 = vmatmul.mubr.f32.gmra.mrb[0].mxu0 %v363
  %v581 = vpop.f32.mrb[0].mxu0
  %v582 = vadd.f32 %v438, %v581
  %v583 = vpop.f32.mrb[0].mxu0
  %584 = vmatprep.mubr.f32.mxu0 0.0
  %585 = vmatmul.mubr.f32.gmra.mrb[0].mxu0 %v364
  %v586 = vpop.f32.mrb[0].mxu0
  %v587 = vadd.f32 %v443, %v586
  %v588 = vpop.f32.mrb[0].mxu0
  %589 = vmatprep.mubr.f32.mxu0 0.0
  %590 = vmatmul.mubr.f32.gmra.mrb[0].mxu0 %v365
  %v591 = vpop.f32.mrb[0].mxu0
  %v592 = vadd.f32 %v448, %v591
  %v593 = vpop.f32.mrb[0].mxu0
  %594 = vmatprep.mubr.f32.mxu0 0.0
  %595 = vmatmul.mubr.f32.gmra.mrb[0].mxu0 %v366
  %v596 = vpop.f32.mrb[0].mxu0
  %v597 = vadd.f32 %v453, %v596
  %v598 = vpop.f32.mrb[0].mxu0
  %599 = vmatprep.mubr.f32.mxu0 0.0
  %600 = vmatmul.mubr.f32.gmra.mrb[0].mxu0 %v367
  %v601 = vpop.f32.mrb[0].mxu0
  %v602 = vadd.f32 %v458, %v601
  %v603 = vpop.f32.mrb[0].mxu0
  %604 = vmatprep.mubr.f32.mxu0 0.0
  %605 = vmatmul.mubr.f32.gmra.mrb[0].mxu0 %v368
  %v606 = vpop.f32.mrb[0].mxu0
  %v607 = vadd.f32 %v463, %v606
  %v608 = vpop.f32.mrb[0].mxu0
  %609 = vdwg.mxu0
  %v610 = vmax.f32 %v532, 0.0
  %v611 = vmax.f32 %v537, 0.0
  %v612 = vmax.f32 %v542, 0.0
  %v613 = vmax.f32 %v547, 0.0
  %v614 = vmax.f32 %v552, 0.0
  %v615 = vmax.f32 %v557, 0.0
  %v616 = vmax.f32 %v562, 0.0
  %v617 = vmax.f32 %v567, 0.0
  %v618 = vmax.f32 %v572, 0.0
  %v619 = vmax.f32 %v577, 0.0
  %v620 = vmax.f32 %v582, 0.0
  %v621 = vmax.f32 %v587, 0.0
  %v622 = vmax.f32 %v592, 0.0
  %v623 = vmax.f32 %v597, 0.0
  %v624 = vmax.f32 %v602, 0.0
  %v625 = vmax.f32 %v607, 0.0
  %v626 = vld [vmem:[%s5] sm:$0xff]
  %v627 = vld [vmem:[%s6] sm:$0xff]
  %629 = vset.pattern.permute.xlu0 0
  %630 = vperm.xlu0 %629, %v627
  %v631 = vpop.permute.xlu0 %630
  %633 = vmatprep.subr.mxu0 0.0
  %634 = vmatpush1.msra.mxu0 %v610
  %635 = vmatprep.subr.mxu0 0.0
  %636 = vmatpush1.msra.mxu0 %v611
  %637 = vmatprep.subr.mxu0 0.0
  %638 = vmatpush1.msra.mxu0 %v612
  %639 = vmatprep.subr.mxu0 0.0
  %640 = vmatpush1.msra.mxu0 %v613
  %641 = vmatprep.subr.mxu0 0.0
  %642 = vmatpush1.msra.mxu0 %v614
  %643 = vmatprep.subr.mxu0 0.0
  %644 = vmatpush1.msra.mxu0 %v615
  %645 = vmatprep.subr.mxu0 0.0
  %646 = vmatpush1.msra.mxu0 %v616
  %647 = vmatprep.subr.mxu0 0.0
  %648 = vmatpush1.msra.mxu0 %v617
  %649 = vmatprep.subr.mxu0 0.0
  %650 = vmatpush1.msra.mxu0 %v618
  %651 = vmatprep.subr.mxu0 0.0
  %652 = vmatpush1.msra.mxu0 %v619
  %653 = vmatprep.subr.mxu0 0.0
  %654 = vmatpush1.msra.mxu0 %v620
  %655 = vmatprep.subr.mxu0 0.0
  %656 = vmatpush1.msra.mxu0 %v621
  %657 = vmatprep.subr.mxu0 0.0
  %658 = vmatpush1.msra.mxu0 %v622
  %659 = vmatprep.subr.mxu0 0.0
  %660 = vmatpush1.msra.mxu0 %v623
  %661 = vmatprep.subr.mxu0 0.0
  %662 = vmatpush1.msra.mxu0 %v624
  %663 = vmatprep.subr.mxu0 0.0
  %664 = vmatpush1.msra.mxu0 %v625
  %665 = vmatprep.subr.mxu0 0.0
  %666 = vmatpush1.msra.mxu0 0.0
  %667 = vmatprep.subr.mxu0 0.0
  %668 = vmatpush1.msra.mxu0 0.0
  %669 = vmatprep.subr.mxu0 0.0
  %670 = vmatpush1.msra.mxu0 0.0
  %671 = vmatprep.subr.mxu0 0.0
  %672 = vmatpush1.msra.mxu0 0.0
  %673 = vmatprep.subr.mxu0 0.0
  %674 = vmatpush1.msra.mxu0 0.0
  %675 = vmatprep.subr.mxu0 0.0
  %676 = vmatpush1.msra.mxu0 0.0
  %677 = vmatprep.subr.mxu0 0.0
  %678 = vmatpush1.msra.mxu0 0.0
  %679 = vmatprep.subr.mxu0 0.0
  %680 = vmatpush1.msra.mxu0 0.0
  %681 = vmatprep.subr.mxu0 0.0
  %682 = vmatpush1.msra.mxu0 0.0
  %683 = vmatprep.subr.mxu0 0.0
  %684 = vmatpush1.msra.mxu0 0.0
  %685 = vmatprep.subr.mxu0 0.0
  %686 = vmatpush1.msra.mxu0 0.0
  %687 = vmatprep.subr.mxu0 0.0
  %688 = vmatpush1.msra.mxu0 0.0
  %689 = vmatprep.subr.mxu0 0.0
  %690 = vmatpush1.msra.mxu0 0.0
  %691 = vmatprep.subr.mxu0 0.0
  %692 = vmatpush1.msra.mxu0 0.0
  %693 = vmatprep.subr.mxu0 0.0
  %694 = vmatpush1.msra.mxu0 0.0
  %695 = vmatprep.subr.mxu0 0.0
  %696 = vmatpush1.msra.mxu0 0.0
  %697 = vmatprep.mubr.f32.mxu0 0.0
  %698 = vmatmul.mubr.f32.gmra.mrb[0].mxu0 %v626
  %v699 = vpop.f32.mrb[0].mxu0
  %v700 = vadd.f32 %v631, %v699
  %v701 = vpop.f32.mrb[0].mxu0
  %702 = vdwg.mxu0
  %703 = vst [vmem:[%s7] sm:$0xff] %v700
  // Predicated region
  $region30: #{network_forward_pallas.1} parent=0 // pred_check
    _
  $region31: #{network_forward_pallas.1} parent=0 // pred_check_branch
    %705 = sbr.rel (0) target = $region33
  $region32: #{network_forward_pallas.1} parent=0 // pred_region
    _
  $region33: #{network_forward_pallas.1} parent=0 // pred_fallthru
    _
  // Predicated region
  $region34: #{network_forward_pallas.1} parent=0 // pred_check
    _
  $region35: #{network_forward_pallas.1} parent=0 // pred_check_branch
    %707 = sbr.rel (0) target = $region37
  $region36: #{network_forward_pallas.1} parent=0 // pred_region
    _
  $region37: #{network_forward_pallas.1} parent=0 // pred_fallthru
    _

</llo_original>
